<compile_context>
chip_gen: v7x
topology: tpu7x:2x2x1
jax: 0.10.0
libtpu: 0.0.40
codegen_flags: <defaults>
</compile_context>

<pallas_src>
import jax
import jax.numpy as jnp
from jax import lax
from jax.experimental import pallas as pl
from jax.experimental.pallas import tpu as pltpu


def _round_up(x, m):
    return (x + m - 1) // m * m


# Per-step live-VMEM target used for tile sizing; leaves ~2x headroom under the
# scoped limit requested below (32 MiB is safe on v5e / v6e / v7x).
_TILE_BUDGET_BYTES = 16 * 1024 * 1024
_VMEM_LIMIT_BYTES = 32 * 1024 * 1024


def _choose_tiles(B, L, D, in_itemsize):
    """VMEM-aware (batch_tile, seq_tile) selection."""
    # Per (batch, position) element: double-buffered xo + f32 k/tanh temps,
    # plus the small lane-dense mask / score / prob tensors.
    per_bl = D * (2 * in_itemsize + 16) + 32
    # Grid-resident weights (double-buffered by the pipeline even though their
    # index_map is constant).
    fixed = 2 * D * D * in_itemsize + 4 * D * 4
    avail = _TILE_BUDGET_BYTES - fixed
    min_rows = B if B <= 8 else 8
    min_cols = L if L <= 128 else 128
    avail = max(avail, per_bl * min_rows * min_cols)  # always emit a legal tile

    # Sequence tile: full L if it fits with the minimal batch tile, otherwise a
    # multiple of 128 (mask / scores keep L on lanes -> 128-divisible or full).
    if per_bl * min_rows * L <= avail:
        lt = L
    else:
        lt = (avail // (per_bl * min_rows)) // 128 * 128
        lt = min(max(lt, 128), L)

    # Batch tile: multiple of 8 (or full batch), VMEM-capped, split into ~8 grid
    # steps so the "parallel" batch axis shards across TensorCores (v7x).
    if B <= 8:
        bt = B
    else:
        cap = max(8, (avail // (per_bl * lt)) // 8 * 8)
        target = _round_up(-(-B // 8), 8)
        bt = max(8, min(cap, target))
        if bt >= B:
            bt = B
    return bt, lt


def _make_kernel(B, L, needs_b_mask, needs_l_mask):
    """Build the kernel with static total sizes / ragged-tile flags baked in."""
    NEG_BIG = -1e30  # strictly below any real (masked) score of ~ -1e12

    def kernel(xo_ref, mask_ref, wk_ref, wo_ref, out_ref, m_sc, l_sc, acc_sc):
        bt, lt, D = xo_ref.shape
        li = pl.program_id(1)

        @pl.when(li == 0)
        def _init():
            m_sc[...] = jnp.full_like(m_sc, NEG_BIG)
            l_sc[...] = jnp.zeros_like(l_sc)
            acc_sc[...] = jnp.zeros_like(acc_sc)

        x = xo_ref[...]                      # (bt, lt, D), input dtype
        mask = mask_ref[...]                 # (bt, lt), f32 0/1

        # Ragged final tiles: sanitize out-of-bounds rows / positions.  These
        # branches are Python-static and vanish when tiles divide evenly.
        valid = None
        if needs_b_mask:
            rows = pl.program_id(0) * bt + lax.broadcasted_iota(
                jnp.int32, (bt, lt), 0)
            valid = rows < B
        if needs_l_mask:
            cols = li * lt + lax.broadcasted_iota(jnp.int32, (bt, lt), 1)
            lv = cols < L
            valid = lv if valid is None else jnp.logical_and(valid, lv)
        if valid is not None:
            mask = jnp.where(valid, mask, 0.0)
            x = jnp.where(valid[:, :, None], x, jnp.zeros((), x.dtype))

        # k_dense: fold (bt, lt) into the matmul M dimension -> one MXU pass.
        k = jnp.dot(x.reshape(bt * lt, D), wk_ref[...],
                    preferred_element_type=jnp.float32)        # (bt*lt, D) f32

        # o_dense (D -> 1): VPU broadcast-multiply + lane reduce (the kernel is
        # HBM-bound, so the XLU reduce is slack; an N=1 MXU matmul would waste
        # columns).
        t = jnp.tanh(k).reshape(bt, lt, D)
        s = jnp.sum(t * wo_ref[...].reshape(1, 1, D), axis=-1)  # (bt, lt) f32

        # Additive mask (same 1e12 constant as the torch module).
        s = s - (1.0 - mask) * 1e12
        if valid is not None:
            s = jnp.where(valid, s, NEG_BIG)

        # Online softmax across the L grid axis.
        m_prev = m_sc[...]                                       # (bt, 1)
        m_new = jnp.maximum(m_prev, jnp.max(s, axis=-1, keepdims=True))
        alpha = jnp.exp(m_prev - m_new)                          # (bt, 1)
        p = jnp.exp(s - m_new)                                   # (bt, lt)
        l_sc[...] = alpha * l_sc[...] + jnp.sum(p, axis=-1, keepdims=True)

        # Weighted sum over this L tile with f32 accumulation and no
        # materialized f32 copy of the xo tile: (bt,1,lt) x (bt,lt,D).
        pv = jnp.einsum("bql,bld->bqd",
                        p.astype(x.dtype).reshape(bt, 1, lt), x,
                        preferred_element_type=jnp.float32)     # (bt, 1, D)
        acc_sc[...] = alpha * acc_sc[...] + pv.reshape(bt, D)
        m_sc[...] = m_new

        @pl.when(li == pl.num_programs(1) - 1)
        def _finalize():
            out_ref[...] = (acc_sc[...] / l_sc[...]).astype(out_ref.dtype)

    return kernel


def attention_pooling_1d(xo, mask, wk, wo, *, block_b=None, block_l=None):
    """xo: (B, L, D), mask: (B, L), wk: k_dense.weight (D, D), wo: o_dense.weight (1, D)."""
    B, L, D = xo.shape
    in_dtype = xo.dtype

    tb, tl = _choose_tiles(B, L, D, jnp.dtype(in_dtype).itemsize)
    if block_b is not None:
        tb = block_b
    if block_l is not None:
        tl = block_l

    needs_b_mask = (B % tb) != 0
    needs_l_mask = (L % tl) != 0

    mask_f = mask.astype(jnp.float32)
    wk_t = wk.T.astype(in_dtype)         # Linear: x @ W^T
    wo_f = wo.astype(jnp.float32)        # (1, D)

    grid = (pl.cdiv(B, tb), pl.cdiv(L, tl))
    kernel = _make_kernel(B, L, needs_b_mask, needs_l_mask)

    out = pl.pallas_call(
        kernel,
        out_shape=jax.ShapeDtypeStruct((B, D), in_dtype),
        grid_spec=pltpu.PrefetchScalarGridSpec(
            num_scalar_prefetch=0,
            grid=grid,
            in_specs=[
                pl.BlockSpec((tb, tl, D), lambda b, l: (b, l, 0)),  # xo tile (D unpadded)
                pl.BlockSpec((tb, tl), lambda b, l: (b, l)),        # mask, L on lanes
                pl.BlockSpec((D, D), lambda b, l: (0, 0)),          # wk^T, grid-resident
                pl.BlockSpec((1, D), lambda b, l: (0, 0)),          # wo row, grid-resident
            ],
            out_specs=pl.BlockSpec((tb, D), lambda b, l: (b, 0)),   # resident across L
            scratch_shapes=[
                pltpu.VMEM((tb, 1), jnp.float32),   # running max m
                pltpu.VMEM((tb, 1), jnp.float32),   # running denom l
                pltpu.VMEM((tb, D), jnp.float32),   # running numerator acc
            ],
        ),
        compiler_params=pltpu.CompilerParams(
            dimension_semantics=("parallel", "arbitrary"),
            vmem_limit_bytes=_VMEM_LIMIT_BYTES,
        ),
    )(xo, mask_f, wk_t, wo_f)
    return out


def attention_pooling_1d_ref(xo, mask, wk, wo):
    """Pure-JAX reference mirroring the PyTorch forward."""
    m = mask[..., None].astype(jnp.float32)
    x = jnp.einsum("bld,ed->ble", xo.astype(jnp.float32), wk)   # k_dense
    x = jnp.einsum("bld,od->blo", jnp.tanh(x), wo)              # o_dense -> (B, L, 1)
    x = x - (1.0 - m) * 1e12
    x = jax.nn.softmax(x, axis=-2)
    return jnp.sum(x * xo.astype(jnp.float32), axis=-2)


if __name__ == "__main__":
    key = jax.random.PRNGKey(0)

    # --- small demo at module-consistent shapes -----------------------------
    B, L, D = 2, 8, 32
    k_xo, k_wk, k_wo, k2_xo, k2_wk, k2_wo, k2_len = jax.random.split(key, 7)

    xo = jax.random.normal(k_xo, (B, L, D), dtype=jnp.float32)
    lengths = jnp.array([L, L - 3], dtype=jnp.int32)
    mask = (jnp.arange(L)[None, :] < lengths[:, None]).astype(jnp.float32)
    wk = jax.random.normal(k_wk, (D, D), dtype=jnp.float32) * 0.1
    wo = jax.random.normal(k_wo, (1, D), dtype=jnp.float32) * 0.1

    out = jax.block_until_ready(attention_pooling_1d(xo, mask, wk, wo))
    ref = attention_pooling_1d_ref(xo, mask, wk, wo)
    assert out.shape == (B, D)
    assert jnp.allclose(out, ref, atol=1e-4, rtol=1e-4), "mismatch vs reference (demo)"

    # --- exercise the tiled / ragged online-softmax path --------------------
    B2, L2, D2 = 20, 200, 48
    xo2 = jax.random.normal(k2_xo, (B2, L2, D2), dtype=jnp.float32)
    lens2 = jax.random.randint(k2_len, (B2,), 1, L2 + 1)
    mask2 = (jnp.arange(L2)[None, :] < lens2[:, None]).astype(jnp.float32)
    wk2 = jax.random.normal(k2_wk, (D2, D2), dtype=jnp.float32) * 0.1
    wo2 = jax.random.normal(k2_wo, (1, D2), dtype=jnp.float32) * 0.1

    out2 = jax.block_until_ready(
        attention_pooling_1d(xo2, mask2, wk2, wo2, block_b=8, block_l=128))
    ref2 = attention_pooling_1d_ref(xo2, mask2, wk2, wo2)
    assert out2.shape == (B2, D2)
    assert jnp.allclose(out2, ref2, atol=1e-4, rtol=1e-4), "mismatch vs reference (tiled)"

    print("KERNEL_OK")
</pallas_src>

<mosaic_0001>
module attributes {stable_mosaic.version = 11 : i64} {
  func.func @kernel(%arg0: i32, %arg1: i32, %arg2: memref<2x8x32xf32, #tpu.memory_space<vmem>>, %arg3: memref<2x8xf32, #tpu.memory_space<vmem>>, %arg4: memref<32x32xf32, #tpu.memory_space<vmem>>, %arg5: memref<1x32xf32, #tpu.memory_space<vmem>>, %arg6: memref<2x32xf32, #tpu.memory_space<vmem>>, %arg7: memref<2x1xf32, #tpu.memory_space<vmem>>, %arg8: memref<2x1xf32, #tpu.memory_space<vmem>>, %arg9: memref<2x32xf32, #tpu.memory_space<vmem>>) attributes {dimension_semantics = [#tpu.dimension_semantics<parallel>, #tpu.dimension_semantics<arbitrary>], iteration_bounds = array<i64: 1, 1>, scalar_prefetch = 0 : i64, scratch_operands = 3 : i64, tpu.core_type = #tpu.core_type<tc>, window_params = [{transform_indices = @transform_0, window_bounds = array<i64: 2, 8, 32>}, {transform_indices = @transform_1, window_bounds = array<i64: 2, 8>}, {pipeline_mode = #tpu.pipeline_mode<synchronous>, transform_indices = @transform_2, window_bounds = array<i64: 32, 32>}, {pipeline_mode = #tpu.pipeline_mode<synchronous>, transform_indices = @transform_3, window_bounds = array<i64: 1, 32>}, {transform_indices = @transform_4, window_bounds = array<i64: 2, 32>}]} {
    %c0_i32 = arith.constant 0 : i32
    %0 = arith.cmpi eq, %arg1, %c0_i32 : i32
    %1 = arith.extui %0 : i1 to i32
    %c0_i32_0 = arith.constant 0 : i32
    %2 = arith.cmpi ne, %1, %c0_i32_0 : i32
    scf.if %2 {
      %cst_29 = arith.constant -1.000000e+30 : f32
      %47 = vector.broadcast %cst_29 : f32 to vector<2x1xf32>
      %c0_30 = arith.constant 0 : index
      %c0_31 = arith.constant 0 : index
      %48 = vector.load %arg7[%c0_30, %c0_31] : memref<2x1xf32, #tpu.memory_space<vmem>>, vector<2x1xf32>
      tpu.vector_store %arg7[%c0_30, %c0_31], %47 {strides = array<i32>} : memref<2x1xf32, #tpu.memory_space<vmem>>, vector<2x1xf32>,
      %cst_32 = arith.constant 0.000000e+00 : f32
      %49 = vector.broadcast %cst_32 : f32 to vector<2x1xf32>
      %c0_33 = arith.constant 0 : index
      %c0_34 = arith.constant 0 : index
      %50 = vector.load %arg8[%c0_33, %c0_34] : memref<2x1xf32, #tpu.memory_space<vmem>>, vector<2x1xf32>
      tpu.vector_store %arg8[%c0_33, %c0_34], %49 {strides = array<i32>} : memref<2x1xf32, #tpu.memory_space<vmem>>, vector<2x1xf32>,
      %cst_35 = arith.constant 0.000000e+00 : f32
      %51 = vector.broadcast %cst_35 : f32 to vector<2x32xf32>
      %c0_36 = arith.constant 0 : index
      %c0_37 = arith.constant 0 : index
      %52 = vector.load %arg9[%c0_36, %c0_37] : memref<2x32xf32, #tpu.memory_space<vmem>>, vector<2x32xf32>
      tpu.vector_store %arg9[%c0_36, %c0_37], %51 {strides = array<i32>} : memref<2x32xf32, #tpu.memory_space<vmem>>, vector<2x32xf32>,
    } else {
    }
    %c0 = arith.constant 0 : index
    %c0_1 = arith.constant 0 : index
    %c0_2 = arith.constant 0 : index
    %3 = vector.load %arg2[%c0, %c0_1, %c0_2] : memref<2x8x32xf32, #tpu.memory_space<vmem>>, vector<2x8x32xf32>
    %c0_3 = arith.constant 0 : index
    %c0_4 = arith.constant 0 : index
    %4 = vector.load %arg3[%c0_3, %c0_4] : memref<2x8xf32, #tpu.memory_space<vmem>>, vector<2x8xf32>
    %5 = vector.shape_cast %3 : vector<2x8x32xf32> to vector<16x32xf32>
    %c0_5 = arith.constant 0 : index
    %c0_6 = arith.constant 0 : index
    %6 = vector.load %arg4[%c0_5, %c0_6] : memref<32x32xf32, #tpu.memory_space<vmem>>, vector<32x32xf32>
    %cst = arith.constant dense<0.000000e+00> : vector<16x32xf32>
    %7 = tpu.matmul %5, %6, %cst {dimension_numbers = #tpu.dot_dimension_numbers<[1], [0], [0], [1], [0, 0, 1, 1], [], []>} : vector<16x32xf32>, vector<32x32xf32>, vector<16x32xf32> -> vector<16x32xf32>
    %8 = math.tanh %7 : vector<16x32xf32>
    %9 = vector.shape_cast %8 : vector<16x32xf32> to vector<2x8x32xf32>
    %c0_7 = arith.constant 0 : index
    %c0_8 = arith.constant 0 : index
    %10 = vector.load %arg5[%c0_7, %c0_8] : memref<1x32xf32, #tpu.memory_space<vmem>>, vector<1x32xf32>
    %11 = vector.shape_cast %10 : vector<1x32xf32> to vector<1x1x32xf32>
    %12 = vector.broadcast %11 : vector<1x1x32xf32> to vector<2x8x32xf32>
    %13 = arith.mulf %9, %12 : vector<2x8x32xf32>
    %cst_9 = arith.constant dense<0.000000e+00> : vector<2x8xf32>
    %14 = vector.multi_reduction <add>, %13, %cst_9 [2] : vector<2x8x32xf32> to vector<2x8xf32>
    %cst_10 = arith.constant 1.000000e+00 : f32
    %15 = vector.broadcast %cst_10 : f32 to vector<2x8xf32>
    %16 = arith.subf %15, %4 : vector<2x8xf32>
    %cst_11 = arith.constant 9.99999995E+11 : f32
    %17 = vector.broadcast %cst_11 : f32 to vector<2x8xf32>
    %18 = arith.mulf %16, %17 : vector<2x8xf32>
    %19 = arith.subf %14, %18 : vector<2x8xf32>
    %c0_12 = arith.constant 0 : index
    %c0_13 = arith.constant 0 : index
    %20 = vector.load %arg7[%c0_12, %c0_13] : memref<2x1xf32, #tpu.memory_space<vmem>>, vector<2x1xf32>
    %cst_14 = arith.constant dense<0xFF800000> : vector<2xf32>
    %21 = vector.multi_reduction <maximumf>, %19, %cst_14 [1] : vector<2x8xf32> to vector<2xf32>
    %22 = vector.shape_cast %21 : vector<2xf32> to vector<2x1xf32>
    %23 = arith.maximumf %20, %22 : vector<2x1xf32>
    %24 = arith.subf %20, %23 : vector<2x1xf32>
    %25 = math.exp %24 : vector<2x1xf32>
    %26 = vector.broadcast %23 : vector<2x1xf32> to vector<2x8xf32>
    %27 = arith.subf %19, %26 : vector<2x8xf32>
    %28 = math.exp %27 : vector<2x8xf32>
    %c0_15 = arith.constant 0 : index
    %c0_16 = arith.constant 0 : index
    %29 = vector.load %arg8[%c0_15, %c0_16] : memref<2x1xf32, #tpu.memory_space<vmem>>, vector<2x1xf32>
    %30 = arith.mulf %25, %29 : vector<2x1xf32>
    %cst_17 = arith.constant dense<0.000000e+00> : vector<2xf32>
    %31 = vector.multi_reduction <add>, %28, %cst_17 [1] : vector<2x8xf32> to vector<2xf32>
    %32 = vector.shape_cast %31 : vector<2xf32> to vector<2x1xf32>
    %33 = arith.addf %30, %32 : vector<2x1xf32>
    %c0_18 = arith.constant 0 : index
    %c0_19 = arith.constant 0 : index
    %34 = vector.load %arg8[%c0_18, %c0_19] : memref<2x1xf32, #tpu.memory_space<vmem>>, vector<2x1xf32>
    tpu.vector_store %arg8[%c0_18, %c0_19], %33 {strides = array<i32>} : memref<2x1xf32, #tpu.memory_space<vmem>>, vector<2x1xf32>,
    %35 = vector.shape_cast %28 : vector<2x8xf32> to vector<2x1x8xf32>
    "tpu.trace_start"() <{level = 10 : i32, message = "bql,bld->bqd"}> : () -> ()
    %cst_20 = arith.constant dense<0.000000e+00> : vector<2x1x32xf32>
    %36 = tpu.matmul %35, %3, %cst_20 {dimension_numbers = #tpu.dot_dimension_numbers<[2], [1], [1], [2], [0, 0, 0, 1, 1, 2], [0], [0]>} : vector<2x1x8xf32>, vector<2x8x32xf32>, vector<2x1x32xf32> -> vector<2x1x32xf32>
    "tpu.trace_stop"() : () -> ()
    %c0_21 = arith.constant 0 : index
    %c0_22 = arith.constant 0 : index
    %37 = vector.load %arg9[%c0_21, %c0_22] : memref<2x32xf32, #tpu.memory_space<vmem>>, vector<2x32xf32>
    %38 = vector.broadcast %25 : vector<2x1xf32> to vector<2x32xf32>
    %39 = arith.mulf %38, %37 : vector<2x32xf32>
    %40 = vector.shape_cast %36 : vector<2x1x32xf32> to vector<2x32xf32>
    %41 = arith.addf %39, %40 : vector<2x32xf32>
    %c0_23 = arith.constant 0 : index
    %c0_24 = arith.constant 0 : index
    %42 = vector.load %arg9[%c0_23, %c0_24] : memref<2x32xf32, #tpu.memory_space<vmem>>, vector<2x32xf32>
    tpu.vector_store %arg9[%c0_23, %c0_24], %41 {strides = array<i32>} : memref<2x32xf32, #tpu.memory_space<vmem>>, vector<2x32xf32>,
    %c0_25 = arith.constant 0 : index
    %c0_26 = arith.constant 0 : index
    %43 = vector.load %arg7[%c0_25, %c0_26] : memref<2x1xf32, #tpu.memory_space<vmem>>, vector<2x1xf32>
    tpu.vector_store %arg7[%c0_25, %c0_26], %23 {strides = array<i32>} : memref<2x1xf32, #tpu.memory_space<vmem>>, vector<2x1xf32>,
    %c0_i32_27 = arith.constant 0 : i32
    %44 = arith.cmpi eq, %arg1, %c0_i32_27 : i32
    %45 = arith.extui %44 : i1 to i32
    %c0_i32_28 = arith.constant 0 : i32
    %46 = arith.cmpi ne, %45, %c0_i32_28 : i32
    scf.if %46 {
      %c0_29 = arith.constant 0 : index
      %c0_30 = arith.constant 0 : index
      %47 = vector.load %arg9[%c0_29, %c0_30] : memref<2x32xf32, #tpu.memory_space<vmem>>, vector<2x32xf32>
      %c0_31 = arith.constant 0 : index
      %c0_32 = arith.constant 0 : index
      %48 = vector.load %arg8[%c0_31, %c0_32] : memref<2x1xf32, #tpu.memory_space<vmem>>, vector<2x1xf32>
      %49 = vector.broadcast %48 : vector<2x1xf32> to vector<2x32xf32>
      %50 = arith.divf %47, %49 : vector<2x32xf32>
      %c0_33 = arith.constant 0 : index
      %c0_34 = arith.constant 0 : index
      %51 = vector.load %arg6[%c0_33, %c0_34] : memref<2x32xf32, #tpu.memory_space<vmem>>, vector<2x32xf32>
      tpu.vector_store %arg6[%c0_33, %c0_34], %50 {strides = array<i32>} : memref<2x32xf32, #tpu.memory_space<vmem>>, vector<2x32xf32>,
    } else {
    }
    return
  }
  func.func @transform_0(%arg0: i32, %arg1: i32) -> (i32, i32, i32) {
    %c0_i32 = arith.constant 0 : i32
    %c0_i32_0 = arith.constant 0 : i32
    return %arg0, %arg1, %c0_i32 : i32, i32, i32
  }
  func.func @transform_1(%arg0: i32, %arg1: i32) -> (i32, i32) {
    %c0_i32 = arith.constant 0 : i32
    return %arg0, %arg1 : i32, i32
  }
  func.func @transform_2(%arg0: i32, %arg1: i32) -> (i32, i32) {
    %c0_i32 = arith.constant 0 : i32
    %c0_i32_0 = arith.constant 0 : i32
    %c0_i32_1 = arith.constant 0 : i32
    return %c0_i32, %c0_i32_0 : i32, i32
  }
  func.func @transform_3(%arg0: i32, %arg1: i32) -> (i32, i32) {
    %c0_i32 = arith.constant 0 : i32
    %c0_i32_0 = arith.constant 0 : i32
    %c0_i32_1 = arith.constant 0 : i32
    return %c0_i32, %c0_i32_0 : i32, i32
  }
  func.func @transform_4(%arg0: i32, %arg1: i32) -> (i32, i32) {
    %c0_i32 = arith.constant 0 : i32
    %c0_i32_0 = arith.constant 0 : i32
    return %arg0, %c0_i32 : i32, i32
  }
}

</mosaic_0001>

<llo_original>
// kernel: tpu_custom_call.1
$region0: #{tpu_custom_call.1}
  #allocation0 [shape = 'u32[]', space=smem, size = 0x4, offset = 0x4, fixed_abs, tag = 'smem constant byte address 0x4 - core index']
  #allocation1 [shape = 'u32[144,128]{1,0:T(1,128)}', space=vmem, size = 0x12000, scoped, tag = 'internal scratch']
  #allocation2 [shape = 'f32[2,1]{1,0:T(2,128)}', space=vmem, size = 0x400, scoped, tag = 'scratch operand']
  #allocation3 [shape = 'f32[2,1]{1,0:T(2,128)}', space=vmem, size = 0x400, scoped, tag = 'scratch operand']
  #allocation4 [shape = 'f32[2,32]{1,0:T(2,128)}', space=vmem, size = 0x400, scoped, tag = 'scratch operand']
  %s0 = inlined_call_operand.hbm [shape: f32[2,8,32], index: 0, kind: input, shape index: {}]
  %s1 = inlined_call_operand.vmem [shape: f32[2,8], index: 1, kind: input, shape index: {}]
  %s2 = inlined_call_operand.hbm [shape: f32[32,32], index: 2, kind: input, shape index: {}]
  %s3 = inlined_call_operand.vmem [shape: f32[1,32], index: 3, kind: input, shape index: {}]
  %s4 = inlined_call_operand.hbm [shape: f32[2,32], index: 4, kind: output, shape index: {}]
  %s5 = sld [smem:[#allocation0]]
  $region42: #{tpu_custom_call.1} parent=0
    _
  %s7 = ssub.s32 1, %s5
  %s8 = scalar_select 0, %s7, %s5
  $region1: #{tpu_custom_call.1} parent=0
    #allocation5 [shape = 'u8[8192]{0}', space=vmem, size = 0x2000, scoped, tag = 'input window, operand 0, single buffered']
    #allocation6 [shape = 's32[1]{0}', space=sflag, size = 0x4, scoped, tag = 'scoped memory for tpu_custom_call.1']
    #allocation7 [shape = 's32[1]{0}', space=sflag, size = 0x4, scoped, tag = 'scoped memory for tpu_custom_call.1']
    #allocation8 [shape = 'u8[16384]{0}', space=vmem, size = 0x4000, scoped, tag = 'input window, operand 2, single buffered']
    #allocation9 [shape = 's32[1]{0}', space=sflag, size = 0x4, scoped, tag = 'scoped memory for tpu_custom_call.1']
    #allocation10 [shape = 'u8[1024]{0}', space=vmem, size = 0x400, scoped, tag = 'output window, operand 0, single buffered']
    %9 = vsyncpa [#allocation6], 0
    %10 = vsyncpa [#allocation9], 0
    %11 = vsyncpa [#allocation7], 0
    // Predicated region
    $region2: #{tpu_custom_call.1} parent=1 // pred_check
      _
    $region3: #{tpu_custom_call.1} parent=1 // pred_check_branch
      %13 = sbr.rel (0) target = $region5
    $region4: #{tpu_custom_call.1} parent=1 // pred_region
      %s15 = ssub.s32 256, 256
      %16 = vsyncadd [#allocation6], %s15
      %s17 = sshll.u32 [#allocation5], 4
      %s18 = int_to_ptr.vmem [resolvable:$true] %s17
      %23 = dma.hbm_to_vmem [thread:$0]  %s0, 256, %s18, [#allocation6], 128, 128, 8
    $region5: #{tpu_custom_call.1} parent=1 // pred_fallthru
      _
    // Predicated region
    $region6: #{tpu_custom_call.1} parent=1 // pred_check
      _
    $region7: #{tpu_custom_call.1} parent=1 // pred_check_branch
      %25 = sbr.rel (0) target = $region9
    $region8: #{tpu_custom_call.1} parent=1 // pred_region
      _
    $region9: #{tpu_custom_call.1} parent=1 // pred_fallthru
      _
    // Predicated region
    $region10: #{tpu_custom_call.1} parent=1 // pred_check
      _
    $region11: #{tpu_custom_call.1} parent=1 // pred_check_branch
      %27 = sbr.rel (0) target = $region13
    $region12: #{tpu_custom_call.1} parent=1 // pred_region
      %s29 = ssub.s32 512, 512
      %30 = vsyncadd [#allocation9], %s29
      %s31 = sshll.u32 [#allocation8], 4
      %s32 = int_to_ptr.vmem [resolvable:$true] %s31
      %37 = dma.hbm_to_vmem [thread:$0]  %s2, 512, %s32, [#allocation9], 128, 128, 8
    $region13: #{tpu_custom_call.1} parent=1 // pred_fallthru
      _
    // Predicated region
    $region14: #{tpu_custom_call.1} parent=1 // pred_check
      _
    $region15: #{tpu_custom_call.1} parent=1 // pred_check_branch
      %39 = sbr.rel (0) target = $region17
    $region16: #{tpu_custom_call.1} parent=1 // pred_region
      _
    $region17: #{tpu_custom_call.1} parent=1 // pred_fallthru
      _
    // Predicated region
    $region18: #{tpu_custom_call.1} parent=1 // pred_check
      _
    $region19: #{tpu_custom_call.1} parent=1 // pred_check_branch
      %41 = sbr.rel (0) target = $region21
    $region20: #{tpu_custom_call.1} parent=1 // pred_region
      %42 = dma.done [#allocation6], 256
    $region21: #{tpu_custom_call.1} parent=1 // pred_fallthru
      _
    // Predicated region
    $region22: #{tpu_custom_call.1} parent=1 // pred_check
      _
    $region23: #{tpu_custom_call.1} parent=1 // pred_check_branch
      %44 = sbr.rel (0) target = $region25
    $region24: #{tpu_custom_call.1} parent=1 // pred_region
      %45 = dma.done [#allocation9], 512
    $region25: #{tpu_custom_call.1} parent=1 // pred_fallthru
      _
    %p46 = scmp.eq.s32.totalorder 0, 0
    // Predicated region
    $region26: #{tpu_custom_call.1} parent=1 // pred_check
      %p47 = pneg %p46
    $region27: #{tpu_custom_call.1} parent=1 // pred_check_branch
      %49 = sbr.rel (%p47) target = $region29
    $region28: #{tpu_custom_call.1} parent=1 // pred_region
      %vm50 = vcmask 1024
      %51 = vst.msk [vmem:[#allocation2] sm:$0x3] %vm50, -1e+30
      %52 = vst.msk [vmem:[#allocation3] sm:$0x3] %vm50, 0.0
      %vm53 = vcmask 254976
      %54 = vst.msk [vmem:[#allocation4] sm:$0x3] %vm53, 0.0
    $region29: #{tpu_custom_call.1} parent=1 // pred_fallthru
      _
    %v55 = vld [vmem:[#allocation5] sm:$0xff]
    %v56 = vld [vmem:[#allocation5 + $0x8] sm:$0xff]
    %v57 = vld [vmem:[%s1] sm:$0x3]
    %v58 = vld [vmem:[#allocation8] sm:$0xff]
    %v59 = vld [vmem:[#allocation8 + $0x8] sm:$0xff]
    %v60 = vld [vmem:[#allocation8 + $0x10] sm:$0xff]
    %v61 = vld [vmem:[#allocation8 + $0x18] sm:$0xff]
    %vm62 = vcmask 261120
    %v64 = vsel %vm62, %v55, 0
    %v67 = vsel %vm62, %v56, 0
    %69 = vmatprep.subr.mxu0 0.0
    %70 = vmatpush1.msra.mxu0 %v58
    %71 = vmatprep.subr.mxu0 0.0
    %72 = vmatpush1.msra.mxu0 %v59
    %73 = vmatprep.subr.mxu0 0.0
    %74 = vmatpush1.msra.mxu0 %v60
    %75 = vmatprep.subr.mxu0 0.0
    %76 = vmatpush1.msra.mxu0 %v61
    %77 = vmatprep.subr.mxu0 0.0
    %78 = vmatpush1.msra.mxu0 0.0
    %79 = vmatprep.subr.mxu0 0.0
    %80 = vmatpush1.msra.mxu0 0.0
    %81 = vmatprep.subr.mxu0 0.0
    %82 = vmatpush1.msra.mxu0 0.0
    %83 = vmatprep.subr.mxu0 0.0
    %84 = vmatpush1.msra.mxu0 0.0
    %85 = vmatprep.subr.mxu0 0.0
    %86 = vmatpush1.msra.mxu0 0.0
    %87 = vmatprep.subr.mxu0 0.0
    %88 = vmatpush1.msra.mxu0 0.0
    %89 = vmatprep.subr.mxu0 0.0
    %90 = vmatpush1.msra.mxu0 0.0
    %91 = vmatprep.subr.mxu0 0.0
    %92 = vmatpush1.msra.mxu0 0.0
    %93 = vmatprep.subr.mxu0 0.0
    %94 = vmatpush1.msra.mxu0 0.0
    %95 = vmatprep.subr.mxu0 0.0
    %96 = vmatpush1.msra.mxu0 0.0
    %97 = vmatprep.subr.mxu0 0.0
    %98 = vmatpush1.msra.mxu0 0.0
    %99 = vmatprep.subr.mxu0 0.0
    %100 = vmatpush1.msra.mxu0 0.0
    %101 = vmatprep.subr.mxu0 0.0
    %102 = vmatpush1.msra.mxu0 0.0
    %103 = vmatprep.subr.mxu0 0.0
    %104 = vmatpush1.msra.mxu0 0.0
    %105 = vmatprep.subr.mxu0 0.0
    %106 = vmatpush1.msra.mxu0 0.0
    %107 = vmatprep.subr.mxu0 0.0
    %108 = vmatpush1.msra.mxu0 0.0
    %109 = vmatprep.subr.mxu0 0.0
    %110 = vmatpush1.msra.mxu0 0.0
    %111 = vmatprep.subr.mxu0 0.0
    %112 = vmatpush1.msra.mxu0 0.0
    %113 = vmatprep.subr.mxu0 0.0
    %114 = vmatpush1.msra.mxu0 0.0
    %115 = vmatprep.subr.mxu0 0.0
    %116 = vmatpush1.msra.mxu0 0.0
    %117 = vmatprep.subr.mxu0 0.0
    %118 = vmatpush1.msra.mxu0 0.0
    %119 = vmatprep.subr.mxu0 0.0
    %120 = vmatpush1.msra.mxu0 0.0
    %121 = vmatprep.subr.mxu0 0.0
    %122 = vmatpush1.msra.mxu0 0.0
    %123 = vmatprep.subr.mxu0 0.0
    %124 = vmatpush1.msra.mxu0 0.0
    %125 = vmatprep.subr.mxu0 0.0
    %126 = vmatpush1.msra.mxu0 0.0
    %127 = vmatprep.subr.mxu0 0.0
    %128 = vmatpush1.msra.mxu0 0.0
    %129 = vmatprep.subr.mxu0 0.0
    %130 = vmatpush1.msra.mxu0 0.0
    %131 = vmatprep.subr.mxu0 0.0
    %132 = vmatpush1.msra.mxu0 0.0
    %133 = vmatprep.mubr.f32.mxu0 0.0
    %134 = vmatmul.mubr.f32.gmra.mrb[0].mxu0 %v64
    %v135 = vpop.f32.mrb[0].mxu0
    %v136 = vadd.f32 0.0, %v135
    %v137 = vpop.f32.mrb[0].mxu0
    %138 = vmatprep.mubr.f32.mxu0 0.0
    %139 = vmatmul.mubr.f32.gmra.mrb[0].mxu0 %v67
    %v140 = vpop.f32.mrb[0].mxu0
    %v141 = vadd.f32 0.0, %v140
    %v142 = vpop.f32.mrb[0].mxu0
    %143 = vdwg.mxu0
    %v144 = vtanh.pop %v136
    %v145 = vtanh.pop %v141
    %v146 = vld [vmem:[%s3] sm:$0x1]
    %v148 = vlaneseq
    %v149 = vshrl.u32 %v148, 7
    %v150 = vsub.s32 0, %v149
    %v151 = vrot.slane %v146, %v150
    %v153 = vmul.f32 %v144, %v151
    %v154 = vmul.f32 %v145, %v151
    %v155 = vsel %vm62, %v153, 0.0
    %156 = vadd.xlane.f32.xlu0 %v155
    %v157 = vpop.xlane.xlu0 %156
    %v158 = vsel %vm62, %v154, 0.0
    %159 = vadd.xlane.f32.xlu0 %v158
    %v160 = vpop.xlane.xlu0 %159
    %v161 = vsub.f32 1.0, %v57
    %v162 = vmul.f32 %v161, 1e+12
    %v164 = vlaneseq
    %v165 = vshrl.u32 %v164, 7
    %v166 = vsub.s32 0, %v165
    %v167 = vrot.slane %v162, %v166
    %169 = vbcast.lane.b32.xlu0 %v167, 256
    %v170 = vpop.permute.xlu0 %169
    %v171 = vlaneseq
    %v172 = vshrl.u32 %v171, 7
    %v173 = vsub.s32 1, %v172
    %v174 = vrot.slane %v162, %v173
    %176 = vbcast.lane.b32.xlu0 %v174, 256
    %v177 = vpop.permute.xlu0 %176
    %v180 = vsub.f32 %v157, %v170
    %v181 = vsub.f32 %v160, %v177
    %v182 = vld [vmem:[#allocation2] sm:$0x3]
    %185 = vset.pattern.permute.xlu0 0
    %186 = vperm.xlu0 %185, %v180
    %v187 = vpop.permute.xlu0 %186
    %188 = vset.pattern.permute.xlu0 0
    %189 = vperm.xlu0 %188, %v181
    %v190 = vpop.permute.xlu0 %189
    %v191 = vlaneseq
    %v192 = vand.u32 %v191, 127
    %v193 = vlaneseq
    %v194 = vshrl.u32 %v193, 7
    %v195 = vsub.s32 %v192, %v194
    %v196 = vrot.slane %v187, %v195
    %v197 = vlaneseq
    %v198 = vshrl.u32 %v197, 7
    %v199 = vsub.s32 %v192, %v198
    %v200 = vrot.slane %v190, %v199
    %vm201 = vcmask 1041409
    %v202 = vsel %vm201, %v200, %v196
    %vm204 = vcmask 58368
    %v205 = vsel %vm204, %v202, -inf
    %206 = vmax.xlane.f32.xlu0 %v205
    %v207 = vpop.xlane.xlu0 %206
    %v208 = vmax.f32 %v182, %v207
    %v209 = vsub.f32 %v182, %v208
    %v210 = vmul.f32 %v209, 1.442695
    %v211 = vpow.pop %v210
    %213 = vset.pattern.permute.xlu0 0
    %214 = vperm.xlu0 %213, %v208
    %v215 = vpop.permute.xlu0 %214
    %v216 = vlaneseq
    %v217 = vshrl.u32 %v216, 7
    %v218 = vsub.s32 0, %v217
    %v219 = vrot.slane %v215, %v218
    %v220 = vlaneseq
    %v221 = vshrl.u32 %v220, 7
    %v222 = vsub.s32 1, %v221
    %v223 = vrot.slane %v215, %v222
    %v226 = vsub.f32 %v180, %v219
    %v227 = vsub.f32 %v181, %v223
    %v228 = vmul.f32 %v226, 1.442695
    %v229 = vpow.pop %v228
    %v230 = vmul.f32 %v227, 1.442695
    %v231 = vpow.pop %v230
    %v232 = vld [vmem:[#allocation3] sm:$0x3]
    %v233 = vmul.f32 %v211, %v232
    %236 = vset.pattern.permute.xlu0 0
    %237 = vperm.xlu0 %236, %v229
    %v238 = vpop.permute.xlu0 %237
    %239 = vset.pattern.permute.xlu0 0
    %240 = vperm.xlu0 %239, %v231
    %v241 = vpop.permute.xlu0 %240
    %v242 = vlaneseq
    %v243 = vshrl.u32 %v242, 7
    %v244 = vsub.s32 %v192, %v243
    %v245 = vrot.slane %v238, %v244
    %v246 = vlaneseq
    %v247 = vshrl.u32 %v246, 7
    %v248 = vsub.s32 %v192, %v247
    %v249 = vrot.slane %v241, %v248
    %v250 = vsel %vm201, %v249, %v245
    %v252 = vsel %vm204, %v250, 0.0
    %253 = vadd.xlane.f32.xlu0 %v252
    %v254 = vpop.xlane.xlu0 %253
    %v255 = vadd.f32 %v233, %v254
    %vm256 = vcmask 1024
    %257 = vst.msk [vmem:[#allocation3] sm:$0x3] %vm256, %v255
    %vm258 = vcmask 64512
    %v259 = vsel %vm258, %v245, 0
    %261 = vmatprep.subr.mxu0 0.0
    %262 = vmatpush1.msra.mxu0 %v55
    %263 = vmatprep.subr.mxu0 0.0
    %264 = vmatpush1.msra.mxu0 0.0
    %265 = vmatprep.subr.mxu0 0.0
    %266 = vmatpush1.msra.mxu0 0.0
    %267 = vmatprep.subr.mxu0 0.0
    %268 = vmatpush1.msra.mxu0 0.0
    %269 = vmatprep.subr.mxu0 0.0
    %270 = vmatpush1.msra.mxu0 0.0
    %271 = vmatprep.subr.mxu0 0.0
    %272 = vmatpush1.msra.mxu0 0.0
    %273 = vmatprep.subr.mxu0 0.0
    %274 = vmatpush1.msra.mxu0 0.0
    %275 = vmatprep.subr.mxu0 0.0
    %276 = vmatpush1.msra.mxu0 0.0
    %277 = vmatprep.subr.mxu0 0.0
    %278 = vmatpush1.msra.mxu0 0.0
    %279 = vmatprep.subr.mxu0 0.0
    %280 = vmatpush1.msra.mxu0 0.0
    %281 = vmatprep.subr.mxu0 0.0
    %282 = vmatpush1.msra.mxu0 0.0
    %283 = vmatprep.subr.mxu0 0.0
    %284 = vmatpush1.msra.mxu0 0.0
    %285 = vmatprep.subr.mxu0 0.0
    %286 = vmatpush1.msra.mxu0 0.0
    %287 = vmatprep.subr.mxu0 0.0
    %288 = vmatpush1.msra.mxu0 0.0
    %289 = vmatprep.subr.mxu0 0.0
    %290 = vmatpush1.msra.mxu0 0.0
    %291 = vmatprep.subr.mxu0 0.0
    %292 = vmatpush1.msra.mxu0 0.0
    %293 = vmatprep.subr.mxu0 0.0
    %294 = vmatpush1.msra.mxu0 0.0
    %295 = vmatprep.subr.mxu0 0.0
    %296 = vmatpush1.msra.mxu0 0.0
    %297 = vmatprep.subr.mxu0 0.0
    %298 = vmatpush1.msra.mxu0 0.0
    %299 = vmatprep.subr.mxu0 0.0
    %300 = vmatpush1.msra.mxu0 0.0
    %301 = vmatprep.subr.mxu0 0.0
    %302 = vmatpush1.msra.mxu0 0.0
    %303 = vmatprep.subr.mxu0 0.0
    %304 = vmatpush1.msra.mxu0 0.0
    %305 = vmatprep.subr.mxu0 0.0
    %306 = vmatpush1.msra.mxu0 0.0
    %307 = vmatprep.subr.mxu0 0.0
    %308 = vmatpush1.msra.mxu0 0.0
    %309 = vmatprep.subr.mxu0 0.0
    %310 = vmatpush1.msra.mxu0 0.0
    %311 = vmatprep.subr.mxu0 0.0
    %312 = vmatpush1.msra.mxu0 0.0
    %313 = vmatprep.subr.mxu0 0.0
    %314 = vmatpush1.msra.mxu0 0.0
    %315 = vmatprep.subr.mxu0 0.0
    %316 = vmatpush1.msra.mxu0 0.0
    %317 = vmatprep.subr.mxu0 0.0
    %318 = vmatpush1.msra.mxu0 0.0
    %319 = vmatprep.subr.mxu0 0.0
    %320 = vmatpush1.msra.mxu0 0.0
    %321 = vmatprep.subr.mxu0 0.0
    %322 = vmatpush1.msra.mxu0 0.0
    %323 = vmatprep.subr.mxu0 0.0
    %324 = vmatpush1.msra.mxu0 0.0
    %325 = vmatprep.mubr.f32.mxu0 0.0
    %326 = vmatmul.mubr.f32.gmra.mrb[0].mxu0 %v259
    %v327 = vpop.f32.mrb[0].mxu0
    %v328 = vadd.f32 0.0, %v327
    %v329 = vpop.f32.mrb[0].mxu0
    %330 = vdwg.mxu0
    %v331 = vsel %vm258, %v249, 0
    %333 = vmatprep.subr.mxu0 0.0
    %334 = vmatpush1.msra.mxu0 %v56
    %335 = vmatprep.subr.mxu0 0.0
    %336 = vmatpush1.msra.mxu0 0.0
    %337 = vmatprep.subr.mxu0 0.0
    %338 = vmatpush1.msra.mxu0 0.0
    %339 = vmatprep.subr.mxu0 0.0
    %340 = vmatpush1.msra.mxu0 0.0
    %341 = vmatprep.subr.mxu0 0.0
    %342 = vmatpush1.msra.mxu0 0.0
    %343 = vmatprep.subr.mxu0 0.0
    %344 = vmatpush1.msra.mxu0 0.0
    %345 = vmatprep.subr.mxu0 0.0
    %346 = vmatpush1.msra.mxu0 0.0
    %347 = vmatprep.subr.mxu0 0.0
    %348 = vmatpush1.msra.mxu0 0.0
    %349 = vmatprep.subr.mxu0 0.0
    %350 = vmatpush1.msra.mxu0 0.0
    %351 = vmatprep.subr.mxu0 0.0
    %352 = vmatpush1.msra.mxu0 0.0
    %353 = vmatprep.subr.mxu0 0.0
    %354 = vmatpush1.msra.mxu0 0.0
    %355 = vmatprep.subr.mxu0 0.0
    %356 = vmatpush1.msra.mxu0 0.0
    %357 = vmatprep.subr.mxu0 0.0
    %358 = vmatpush1.msra.mxu0 0.0
    %359 = vmatprep.subr.mxu0 0.0
    %360 = vmatpush1.msra.mxu0 0.0
    %361 = vmatprep.subr.mxu0 0.0
    %362 = vmatpush1.msra.mxu0 0.0
    %363 = vmatprep.subr.mxu0 0.0
    %364 = vmatpush1.msra.mxu0 0.0
    %365 = vmatprep.subr.mxu0 0.0
    %366 = vmatpush1.msra.mxu0 0.0
    %367 = vmatprep.subr.mxu0 0.0
    %368 = vmatpush1.msra.mxu0 0.0
    %369 = vmatprep.subr.mxu0 0.0
    %370 = vmatpush1.msra.mxu0 0.0
    %371 = vmatprep.subr.mxu0 0.0
    %372 = vmatpush1.msra.mxu0 0.0
    %373 = vmatprep.subr.mxu0 0.0
    %374 = vmatpush1.msra.mxu0 0.0
    %375 = vmatprep.subr.mxu0 0.0
    %376 = vmatpush1.msra.mxu0 0.0
    %377 = vmatprep.subr.mxu0 0.0
    %378 = vmatpush1.msra.mxu0 0.0
    %379 = vmatprep.subr.mxu0 0.0
    %380 = vmatpush1.msra.mxu0 0.0
    %381 = vmatprep.subr.mxu0 0.0
    %382 = vmatpush1.msra.mxu0 0.0
    %383 = vmatprep.subr.mxu0 0.0
    %384 = vmatpush1.msra.mxu0 0.0
    %385 = vmatprep.subr.mxu0 0.0
    %386 = vmatpush1.msra.mxu0 0.0
    %387 = vmatprep.subr.mxu0 0.0
    %388 = vmatpush1.msra.mxu0 0.0
    %389 = vmatprep.subr.mxu0 0.0
    %390 = vmatpush1.msra.mxu0 0.0
    %391 = vmatprep.subr.mxu0 0.0
    %392 = vmatpush1.msra.mxu0 0.0
    %393 = vmatprep.subr.mxu0 0.0
    %394 = vmatpush1.msra.mxu0 0.0
    %395 = vmatprep.subr.mxu0 0.0
    %396 = vmatpush1.msra.mxu0 0.0
    %397 = vmatprep.mubr.f32.mxu0 0.0
    %398 = vmatmul.mubr.f32.gmra.mrb[0].mxu0 %v331
    %v399 = vpop.f32.mrb[0].mxu0
    %v400 = vadd.f32 0.0, %v399
    %v401 = vpop.f32.mrb[0].mxu0
    %402 = vdwg.mxu0
    %v403 = vld [vmem:[#allocation4] sm:$0x3]
    %405 = vset.pattern.permute.xlu0 0
    %406 = vperm.xlu0 %405, %v211
    %v407 = vpop.permute.xlu0 %406
    %v409 = vmul.f32 %v407, %v403
    %v412 = vrot.slane %v400, 7
    %v413 = vsel %vm201, %v412, %v328
    %v415 = vadd.f32 %v409, %v413
    %vm416 = vcmask 254976
    %417 = vst.msk [vmem:[#allocation4] sm:$0x3] %vm416, %v415
    %418 = vst.msk [vmem:[#allocation2] sm:$0x3] %vm256, %v208
    // Predicated region
    $region30: #{tpu_custom_call.1} parent=1 // pred_check
      %p419 = pneg %p46
    $region31: #{tpu_custom_call.1} parent=1 // pred_check_branch
      %421 = sbr.rel (%p419) target = $region33
    $region32: #{tpu_custom_call.1} parent=1 // pred_region
      %v422 = vld [vmem:[#allocation4] sm:$0x3]
      %v423 = vld [vmem:[#allocation3] sm:$0x3]
      %425 = vset.pattern.permute.xlu0 0
      %426 = vperm.xlu0 %425, %v423
      %v427 = vpop.permute.xlu0 %426
      %v429 = vrcp.pop %v427
      %v430 = vmul.f32 %v422, %v429
      %431 = vst.msk [vmem:[#allocation10] sm:$0x3] %vm416, %v430
    $region33: #{tpu_custom_call.1} parent=1 // pred_fallthru
      _
    // Predicated region
    $region34: #{tpu_custom_call.1} parent=1 // pred_check
      _
    $region35: #{tpu_custom_call.1} parent=1 // pred_check_branch
      %433 = sbr.rel (0) target = $region37
    $region36: #{tpu_custom_call.1} parent=1 // pred_region
      %s435 = ssub.s32 32, 32
      %436 = vsyncadd [#allocation7], %s435
      %s438 = sshll.u32 [#allocation10], 4
      %s439 = int_to_ptr.vmem [resolvable:$true] %s438
      %441 = dma.vmem_to_hbm [thread:$0]  %s439, 32, %s4, [#allocation7]
    $region37: #{tpu_custom_call.1} parent=1 // pred_fallthru
      _
    // Predicated region
    $region38: #{tpu_custom_call.1} parent=1 // pred_check
      _
    $region39: #{tpu_custom_call.1} parent=1 // pred_check_branch
      %443 = sbr.rel (0) target = $region41
    $region40: #{tpu_custom_call.1} parent=1 // pred_region
      %444 = dma.done [#allocation7], 32
    $region41: #{tpu_custom_call.1} parent=1 // pred_fallthru
      _
    %445 = vsyncpa [#allocation6], 1
    %446 = vsyncpa [#allocation9], 1
    %447 = vsyncpa [#allocation7], 1

</llo_original>
